<compile_context>
chip_gen: v6e
topology: v6e:2x2x1
jax: 0.10.0
libtpu: 0.0.40
codegen_flags: <defaults>
</compile_context>

<pallas_src>
import jax
import jax.numpy as jnp
from jax.experimental import pallas as pl
from jax.experimental.pallas import tpu as pltpu

INPUT_SIZE = 10
HIDDEN = 8
NUM_CLASSES = 2

LANE = 128
TILE_B_MAX = 131072                 # ~24 MiB double-buffered footprint (v7x-safe)
VMEM_LIMIT_BYTES = 40 * 1024 * 1024 # headroom over the ~24 MiB tile footprint


def _round_up(n, m):
    return ((n + m - 1) // m) * m


def _choose_tile_b(batch):
    """Largest VMEM-safe tile, but aim for >=2 grid steps (v7x megacore)."""
    half = _round_up(pl.cdiv(batch, 2), LANE)
    return max(LANE, min(TILE_B_MAX, half))


def dnn_kernel(x_ref, w1_ref, b1_ref, w2_ref, b2_ref, out_ref):
    # x_ref : [INPUT_SIZE, TILE_B]     w1_ref: [HIDDEN, INPUT_SIZE]
    # b1_ref: [HIDDEN, 1]              w2_ref: [NUM_CLASSES, HIDDEN]
    # b2_ref: [NUM_CLASSES, 1]         out_ref:[NUM_CLASSES, TILE_B]
    x = x_ref[...]
    h = jnp.dot(w1_ref[...], x, preferred_element_type=jnp.float32)
    h = jnp.maximum(h + b1_ref[...], 0.0)          # ReLU; bias bcast over lanes
    y = jnp.dot(w2_ref[...], h, preferred_element_type=jnp.float32)
    out_ref[...] = (y + b2_ref[...]).astype(out_ref.dtype)


@jax.jit
def dnn_forward_feature_major(x_fm, w1, b1, w2, b2):
    """Fast path.  x_fm: [INPUT_SIZE, B] f32 (feature-major); returns
    [NUM_CLASSES, B].  No layout copies beyond (at most) one-tile batch pad."""
    B = x_fm.shape[1]
    tile_b = _choose_tile_b(B)
    n_tiles = pl.cdiv(B, tile_b)
    b_pad = n_tiles * tile_b

    if b_pad != B:                      # skip the pad entirely when divisible
        x_fm = jnp.pad(x_fm, ((0, 0), (0, b_pad - B)))

    w1_t = w1.T                          # [HIDDEN, INPUT_SIZE]
    w2_t = w2.T                          # [NUM_CLASSES, HIDDEN]
    b1_c = b1.reshape(HIDDEN, 1)
    b2_c = b2.reshape(NUM_CLASSES, 1)

    out_fm = pl.pallas_call(
        dnn_kernel,
        out_shape=jax.ShapeDtypeStruct((NUM_CLASSES, b_pad), jnp.float32),
        grid_spec=pltpu.PrefetchScalarGridSpec(
            num_scalar_prefetch=0,
            grid=(n_tiles,),
            in_specs=[
                pl.BlockSpec((INPUT_SIZE, tile_b), lambda i: (0, i)),   # x tile
                pl.BlockSpec((HIDDEN, INPUT_SIZE), lambda i: (0, 0)),   # w1 (resident)
                pl.BlockSpec((HIDDEN, 1), lambda i: (0, 0)),            # b1 (resident)
                pl.BlockSpec((NUM_CLASSES, HIDDEN), lambda i: (0, 0)),  # w2 (resident)
                pl.BlockSpec((NUM_CLASSES, 1), lambda i: (0, 0)),       # b2 (resident)
            ],
            out_specs=pl.BlockSpec((NUM_CLASSES, tile_b), lambda i: (0, i)),
        ),
        compiler_params=pltpu.CompilerParams(
            dimension_semantics=("parallel",),      # megacore sharding on v7x
            vmem_limit_bytes=VMEM_LIMIT_BYTES,
        ),
    )(x_fm, w1_t, b1_c, w2_t, b2_c)

    if b_pad != B:
        out_fm = out_fm[:, :B]           # drop padded columns (tiny slice)
    return out_fm


@jax.jit
def dnn_forward(x, w1, b1, w2, b2):
    """Module-faithful interface: x [B, INPUT_SIZE] -> [B, NUM_CLASSES].
    The in/out transposes are pure layout plumbing; callers that can supply
    feature-major activations should use dnn_forward_feature_major directly
    to avoid the extra HBM pass."""
    out_fm = dnn_forward_feature_major(x.T, w1, b1, w2, b2)
    return out_fm.T


def init_params(key):
    """Deterministic init matching PyTorch Linear shapes (stored transposed:
    w1: [INPUT_SIZE, HIDDEN], w2: [HIDDEN, NUM_CLASSES])."""
    k1, k2, k3, k4 = jax.random.split(key, 4)
    lim1 = 1.0 / jnp.sqrt(INPUT_SIZE)
    lim2 = 1.0 / jnp.sqrt(HIDDEN)
    w1 = jax.random.uniform(k1, (INPUT_SIZE, HIDDEN), jnp.float32, -lim1, lim1)
    b1 = jax.random.uniform(k2, (HIDDEN,), jnp.float32, -lim1, lim1)
    w2 = jax.random.uniform(k3, (HIDDEN, NUM_CLASSES), jnp.float32, -lim2, lim2)
    b2 = jax.random.uniform(k4, (NUM_CLASSES,), jnp.float32, -lim2, lim2)
    return w1, b1, w2, b2


def reference_forward(x, w1, b1, w2, b2):
    h = jnp.maximum(x @ w1 + b1, 0.0)
    return h @ w2 + b2


if __name__ == "__main__":
    key = jax.random.PRNGKey(0)
    kx, kp = jax.random.split(key)
    w1, b1, w2, b2 = init_params(kp)

    # Small batch (single padded tile) and a mid batch (2 grid steps).
    for B in (8, 1000):
        xb = jax.random.normal(jax.random.fold_in(kx, B), (B, INPUT_SIZE),
                               jnp.float32)
        y_ref = reference_forward(xb, w1, b1, w2, b2)

        # Module-faithful path: [B, 10] -> [B, 2]
        y = jax.block_until_ready(dnn_forward(xb, w1, b1, w2, b2))
        assert y.shape == (B, NUM_CLASSES)
        assert jnp.allclose(y, y_ref, atol=1e-5, rtol=1e-5), f"mismatch at B={B}"

        # Zero-copy feature-major fast path: [10, B] -> [2, B]
        y_fm = jax.block_until_ready(
            dnn_forward_feature_major(xb.T, w1, b1, w2, b2))
        assert y_fm.shape == (NUM_CLASSES, B)
        assert jnp.allclose(y_fm.T, y_ref, atol=1e-5, rtol=1e-5), \
            f"fm mismatch at B={B}"

    print("KERNEL_OK")
</pallas_src>

<mosaic_0001>
module attributes {stable_mosaic.version = 11 : i64} {
  func.func @dnn_kernel(%arg0: i32, %arg1: memref<10x128xf32, #tpu.memory_space<vmem>>, %arg2: memref<8x10xf32, #tpu.memory_space<vmem>>, %arg3: memref<8x1xf32, #tpu.memory_space<vmem>>, %arg4: memref<2x8xf32, #tpu.memory_space<vmem>>, %arg5: memref<2x1xf32, #tpu.memory_space<vmem>>, %arg6: memref<2x128xf32, #tpu.memory_space<vmem>>) attributes {dimension_semantics = [#tpu.dimension_semantics<parallel>], iteration_bounds = array<i64: 1>, scalar_prefetch = 0 : i64, scratch_operands = 0 : i64, tpu.core_type = #tpu.core_type<tc>, window_params = [{transform_indices = @transform_0, window_bounds = array<i64: 10, 128>}, {pipeline_mode = #tpu.pipeline_mode<synchronous>, transform_indices = @transform_1, window_bounds = array<i64: 8, 10>}, {pipeline_mode = #tpu.pipeline_mode<synchronous>, transform_indices = @transform_2, window_bounds = array<i64: 8, 1>}, {pipeline_mode = #tpu.pipeline_mode<synchronous>, transform_indices = @transform_3, window_bounds = array<i64: 2, 8>}, {pipeline_mode = #tpu.pipeline_mode<synchronous>, transform_indices = @transform_4, window_bounds = array<i64: 2, 1>}, {transform_indices = @transform_5, window_bounds = array<i64: 2, 128>}]} {
    %c0 = arith.constant 0 : index
    %c0_0 = arith.constant 0 : index
    %0 = vector.load %arg1[%c0, %c0_0] : memref<10x128xf32, #tpu.memory_space<vmem>>, vector<10x128xf32>
    %c0_1 = arith.constant 0 : index
    %c0_2 = arith.constant 0 : index
    %1 = vector.load %arg2[%c0_1, %c0_2] : memref<8x10xf32, #tpu.memory_space<vmem>>, vector<8x10xf32>
    %cst = arith.constant dense<0.000000e+00> : vector<8x128xf32>
    %2 = tpu.matmul %1, %0, %cst {dimension_numbers = #tpu.dot_dimension_numbers<[1], [0], [0], [1], [0, 0, 1, 1], [], []>} : vector<8x10xf32>, vector<10x128xf32>, vector<8x128xf32> -> vector<8x128xf32>
    %c0_3 = arith.constant 0 : index
    %c0_4 = arith.constant 0 : index
    %3 = vector.load %arg3[%c0_3, %c0_4] : memref<8x1xf32, #tpu.memory_space<vmem>>, vector<8x1xf32>
    %4 = vector.broadcast %3 : vector<8x1xf32> to vector<8x128xf32>
    %5 = arith.addf %2, %4 : vector<8x128xf32>
    %cst_5 = arith.constant 0.000000e+00 : f32
    %6 = vector.broadcast %cst_5 : f32 to vector<8x128xf32>
    %7 = arith.maximumf %5, %6 : vector<8x128xf32>
    %c0_6 = arith.constant 0 : index
    %c0_7 = arith.constant 0 : index
    %8 = vector.load %arg4[%c0_6, %c0_7] : memref<2x8xf32, #tpu.memory_space<vmem>>, vector<2x8xf32>
    %cst_8 = arith.constant dense<0.000000e+00> : vector<2x128xf32>
    %9 = tpu.matmul %8, %7, %cst_8 {dimension_numbers = #tpu.dot_dimension_numbers<[1], [0], [0], [1], [0, 0, 1, 1], [], []>} : vector<2x8xf32>, vector<8x128xf32>, vector<2x128xf32> -> vector<2x128xf32>
    %c0_9 = arith.constant 0 : index
    %c0_10 = arith.constant 0 : index
    %10 = vector.load %arg5[%c0_9, %c0_10] : memref<2x1xf32, #tpu.memory_space<vmem>>, vector<2x1xf32>
    %11 = vector.broadcast %10 : vector<2x1xf32> to vector<2x128xf32>
    %12 = arith.addf %9, %11 : vector<2x128xf32>
    %c0_11 = arith.constant 0 : index
    %c0_12 = arith.constant 0 : index
    %13 = vector.load %arg6[%c0_11, %c0_12] : memref<2x128xf32, #tpu.memory_space<vmem>>, vector<2x128xf32>
    tpu.vector_store %arg6[%c0_11, %c0_12], %12 {strides = array<i32>} : memref<2x128xf32, #tpu.memory_space<vmem>>, vector<2x128xf32>,
    return
  }
  func.func @transform_0(%arg0: i32) -> (i32, i32) {
    %c0_i32 = arith.constant 0 : i32
    %c0_i32_0 = arith.constant 0 : i32
    return %c0_i32, %arg0 : i32, i32
  }
  func.func @transform_1(%arg0: i32) -> (i32, i32) {
    %c0_i32 = arith.constant 0 : i32
    %c0_i32_0 = arith.constant 0 : i32
    %c0_i32_1 = arith.constant 0 : i32
    return %c0_i32, %c0_i32_0 : i32, i32
  }
  func.func @transform_2(%arg0: i32) -> (i32, i32) {
    %c0_i32 = arith.constant 0 : i32
    %c0_i32_0 = arith.constant 0 : i32
    %c0_i32_1 = arith.constant 0 : i32
    return %c0_i32, %c0_i32_0 : i32, i32
  }
  func.func @transform_3(%arg0: i32) -> (i32, i32) {
    %c0_i32 = arith.constant 0 : i32
    %c0_i32_0 = arith.constant 0 : i32
    %c0_i32_1 = arith.constant 0 : i32
    return %c0_i32, %c0_i32_0 : i32, i32
  }
  func.func @transform_4(%arg0: i32) -> (i32, i32) {
    %c0_i32 = arith.constant 0 : i32
    %c0_i32_0 = arith.constant 0 : i32
    %c0_i32_1 = arith.constant 0 : i32
    return %c0_i32, %c0_i32_0 : i32, i32
  }
  func.func @transform_5(%arg0: i32) -> (i32, i32) {
    %c0_i32 = arith.constant 0 : i32
    %c0_i32_0 = arith.constant 0 : i32
    return %c0_i32, %arg0 : i32, i32
  }
}

</mosaic_0001>

<llo_original>
// kernel: dnn_forward_feature_major.1
$region0: #{dnn_forward_feature_major.1}
  #allocation0 [shape = 'u32[]', space=smem, size = 0x4, offset = 0x4, fixed_abs, tag = 'smem constant byte address 0x4 - core index']
  #allocation1 [shape = 'u32[144,128]{1,0:T(1,128)}', space=vmem, size = 0x12000, scoped, tag = 'internal scratch']
  %s0 = inlined_call_operand.vmem [shape: f32[10,128], index: 0, kind: input, shape index: {}]
  %s1 = inlined_call_operand.vmem [shape: f32[8,10], index: 1, kind: input, shape index: {}]
  %s2 = inlined_call_operand.vmem [shape: f32[8,1], index: 2, kind: input, shape index: {}]
  %s3 = inlined_call_operand.vmem [shape: f32[2,8], index: 3, kind: input, shape index: {}]
  %s4 = inlined_call_operand.vmem [shape: f32[2,1], index: 4, kind: input, shape index: {}]
  %s5 = inlined_call_operand.hbm [shape: f32[2,128], index: 5, kind: output, shape index: {}]
  %s6 = sld [smem:[#allocation0]]
  $region30: #{dnn_forward_feature_major.1} parent=0
    _
  %s8 = ssub.s32 1, %s6
  %s9 = scalar_select 0, %s8, %s6
  $region1: #{dnn_forward_feature_major.1} parent=0
    #allocation2 [shape = 'u8[1024]{0}', space=vmem, size = 0x400, scoped, tag = 'output window, operand 0, single buffered']
    #allocation3 [shape = 's32[1]{0}', space=sflag, size = 0x4, scoped, tag = 'scoped memory for dnn_forward_feature_major.1']
    %10 = vsyncpa [#allocation3], 0
    // Predicated region
    $region2: #{dnn_forward_feature_major.1} parent=1 // pred_check
      _
    $region3: #{dnn_forward_feature_major.1} parent=1 // pred_check_branch
      %12 = sbr.rel (0) target = $region5
    $region4: #{dnn_forward_feature_major.1} parent=1 // pred_region
      _
    $region5: #{dnn_forward_feature_major.1} parent=1 // pred_fallthru
      _
    // Predicated region
    $region6: #{dnn_forward_feature_major.1} parent=1 // pred_check
      _
    $region7: #{dnn_forward_feature_major.1} parent=1 // pred_check_branch
      %14 = sbr.rel (0) target = $region9
    $region8: #{dnn_forward_feature_major.1} parent=1 // pred_region
      _
    $region9: #{dnn_forward_feature_major.1} parent=1 // pred_fallthru
      _
    // Predicated region
    $region10: #{dnn_forward_feature_major.1} parent=1 // pred_check
      _
    $region11: #{dnn_forward_feature_major.1} parent=1 // pred_check_branch
      %16 = sbr.rel (0) target = $region13
    $region12: #{dnn_forward_feature_major.1} parent=1 // pred_region
      _
    $region13: #{dnn_forward_feature_major.1} parent=1 // pred_fallthru
      _
    // Predicated region
    $region14: #{dnn_forward_feature_major.1} parent=1 // pred_check
      _
    $region15: #{dnn_forward_feature_major.1} parent=1 // pred_check_branch
      %18 = sbr.rel (0) target = $region17
    $region16: #{dnn_forward_feature_major.1} parent=1 // pred_region
      _
    $region17: #{dnn_forward_feature_major.1} parent=1 // pred_fallthru
      _
    // Predicated region
    $region18: #{dnn_forward_feature_major.1} parent=1 // pred_check
      _
    $region19: #{dnn_forward_feature_major.1} parent=1 // pred_check_branch
      %20 = sbr.rel (0) target = $region21
    $region20: #{dnn_forward_feature_major.1} parent=1 // pred_region
      _
    $region21: #{dnn_forward_feature_major.1} parent=1 // pred_fallthru
      _
    %v21 = vld [vmem:[%s0] sm:$0xff]
    %v22 = vld [vmem:[%s0 + $0x8] sm:$0x3]
    %v23 = vld [vmem:[%s1] sm:$0xff]
    %v24 = vld [vmem:[%s2] sm:$0xff]
    %26 = vset.pattern.permute.xlu0 0
    %27 = vperm.xlu0 %26, %v24
    %v28 = vpop.permute.xlu0 %27
    %vm30 = vcmask 80896
    %v32 = vsel %vm30, %v23, 0
    %vm34 = vcmask 1041408
    %v36 = vsel %vm34, %v22, 0
    %38 = vmatprep.subr.mxu0 0.0
    %39 = vmatpush1.msra.mxu0 0.0
    %40 = vmatprep.subr.mxu0 0.0
    %41 = vmatpush1.msra.mxu0 0.0
    %42 = vmatprep.subr.mxu0 0.0
    %43 = vmatpush1.msra.mxu0 0.0
    %44 = vmatprep.subr.mxu0 0.0
    %45 = vmatpush1.msra.mxu0 0.0
    %46 = vmatprep.subr.mxu0 0.0
    %47 = vmatpush1.msra.mxu0 0.0
    %48 = vmatprep.subr.mxu0 0.0
    %49 = vmatpush1.msra.mxu0 0.0
    %50 = vmatprep.subr.mxu0 0.0
    %51 = vmatpush1.msra.mxu0 0.0
    %52 = vmatprep.subr.mxu0 0.0
    %53 = vmatpush1.msra.mxu0 0.0
    %54 = vmatprep.subr.mxu0 0.0
    %55 = vmatpush1.msra.mxu0 0.0
    %56 = vmatprep.subr.mxu0 0.0
    %57 = vmatpush1.msra.mxu0 0.0
    %58 = vmatprep.subr.mxu0 0.0
    %59 = vmatpush1.msra.mxu0 0.0
    %60 = vmatprep.subr.mxu0 0.0
    %61 = vmatpush1.msra.mxu0 0.0
    %62 = vmatprep.subr.mxu0 0.0
    %63 = vmatpush1.msra.mxu0 0.0
    %64 = vmatprep.subr.mxu0 0.0
    %65 = vmatpush1.msra.mxu0 0.0
    %66 = vmatprep.subr.mxu0 0.0
    %67 = vmatpush1.msra.mxu0 %v36
    %68 = vmatprep.subr.mxu0 0.0
    %69 = vmatpush1.msra.mxu0 %v21
    %70 = vmatprep.subr.mxu0 0.0
    %71 = vmatpush2.msra.mxu0 0.0
    %72 = vmatprep.subr.mxu0 0.0
    %73 = vmatpush2.msra.mxu0 0.0
    %74 = vmatprep.subr.mxu0 0.0
    %75 = vmatpush2.msra.mxu0 0.0
    %76 = vmatprep.subr.mxu0 0.0
    %77 = vmatpush2.msra.mxu0 0.0
    %78 = vmatprep.subr.mxu0 0.0
    %79 = vmatpush2.msra.mxu0 0.0
    %80 = vmatprep.subr.mxu0 0.0
    %81 = vmatpush2.msra.mxu0 0.0
    %82 = vmatprep.subr.mxu0 0.0
    %83 = vmatpush2.msra.mxu0 0.0
    %84 = vmatprep.subr.mxu0 0.0
    %85 = vmatpush2.msra.mxu0 0.0
    %86 = vmatprep.subr.mxu0 0.0
    %87 = vmatpush2.msra.mxu0 0.0
    %88 = vmatprep.subr.mxu0 0.0
    %89 = vmatpush2.msra.mxu0 0.0
    %90 = vmatprep.subr.mxu0 0.0
    %91 = vmatpush2.msra.mxu0 0.0
    %92 = vmatprep.subr.mxu0 0.0
    %93 = vmatpush2.msra.mxu0 0.0
    %94 = vmatprep.subr.mxu0 0.0
    %95 = vmatpush2.msra.mxu0 0.0
    %96 = vmatprep.subr.mxu0 0.0
    %97 = vmatpush2.msra.mxu0 0.0
    %98 = vmatprep.subr.mxu0 0.0
    %99 = vmatpush2.msra.mxu0 0.0
    %100 = vmatprep.subr.mxu0 0.0
    %101 = vmatpush2.msra.mxu0 0.0
    %102 = vmatprep.mubr.f32.mxu0 0.0
    %103 = vmatmul.mubr.f32.gmra.mxu0 %v32
    %v104 = vpop.f32.mrf.mxu0
    %v105 = vadd.f32 %v28, %v104
    %v106 = vpop.f32.mrf.mxu0
    %107 = vdwg.mxu0
    %v108 = vmax.f32 %v105, 0.0
    %v109 = vld [vmem:[%s3] sm:$0x3]
    %v110 = vld [vmem:[%s4] sm:$0x3]
    %112 = vset.pattern.permute.xlu0 0
    %113 = vperm.xlu0 %112, %v110
    %v114 = vpop.permute.xlu0 %113
    %vm116 = vcmask 64512
    %v118 = vsel %vm116, %v109, 0
    %120 = vmatprep.subr.mxu0 0.0
    %121 = vmatpush1.msra.mxu0 0.0
    %122 = vmatprep.subr.mxu0 0.0
    %123 = vmatpush1.msra.mxu0 0.0
    %124 = vmatprep.subr.mxu0 0.0
    %125 = vmatpush1.msra.mxu0 0.0
    %126 = vmatprep.subr.mxu0 0.0
    %127 = vmatpush1.msra.mxu0 0.0
    %128 = vmatprep.subr.mxu0 0.0
    %129 = vmatpush1.msra.mxu0 0.0
    %130 = vmatprep.subr.mxu0 0.0
    %131 = vmatpush1.msra.mxu0 0.0
    %132 = vmatprep.subr.mxu0 0.0
    %133 = vmatpush1.msra.mxu0 0.0
    %134 = vmatprep.subr.mxu0 0.0
    %135 = vmatpush1.msra.mxu0 0.0
    %136 = vmatprep.subr.mxu0 0.0
    %137 = vmatpush1.msra.mxu0 0.0
    %138 = vmatprep.subr.mxu0 0.0
    %139 = vmatpush1.msra.mxu0 0.0
    %140 = vmatprep.subr.mxu0 0.0
    %141 = vmatpush1.msra.mxu0 0.0
    %142 = vmatprep.subr.mxu0 0.0
    %143 = vmatpush1.msra.mxu0 0.0
    %144 = vmatprep.subr.mxu0 0.0
    %145 = vmatpush1.msra.mxu0 0.0
    %146 = vmatprep.subr.mxu0 0.0
    %147 = vmatpush1.msra.mxu0 0.0
    %148 = vmatprep.subr.mxu0 0.0
    %149 = vmatpush1.msra.mxu0 0.0
    %150 = vmatprep.subr.mxu0 0.0
    %151 = vmatpush1.msra.mxu0 %v108
    %152 = vmatprep.subr.mxu0 0.0
    %153 = vmatpush2.msra.mxu0 0.0
    %154 = vmatprep.subr.mxu0 0.0
    %155 = vmatpush2.msra.mxu0 0.0
    %156 = vmatprep.subr.mxu0 0.0
    %157 = vmatpush2.msra.mxu0 0.0
    %158 = vmatprep.subr.mxu0 0.0
    %159 = vmatpush2.msra.mxu0 0.0
    %160 = vmatprep.subr.mxu0 0.0
    %161 = vmatpush2.msra.mxu0 0.0
    %162 = vmatprep.subr.mxu0 0.0
    %163 = vmatpush2.msra.mxu0 0.0
    %164 = vmatprep.subr.mxu0 0.0
    %165 = vmatpush2.msra.mxu0 0.0
    %166 = vmatprep.subr.mxu0 0.0
    %167 = vmatpush2.msra.mxu0 0.0
    %168 = vmatprep.subr.mxu0 0.0
    %169 = vmatpush2.msra.mxu0 0.0
    %170 = vmatprep.subr.mxu0 0.0
    %171 = vmatpush2.msra.mxu0 0.0
    %172 = vmatprep.subr.mxu0 0.0
    %173 = vmatpush2.msra.mxu0 0.0
    %174 = vmatprep.subr.mxu0 0.0
    %175 = vmatpush2.msra.mxu0 0.0
    %176 = vmatprep.subr.mxu0 0.0
    %177 = vmatpush2.msra.mxu0 0.0
    %178 = vmatprep.subr.mxu0 0.0
    %179 = vmatpush2.msra.mxu0 0.0
    %180 = vmatprep.subr.mxu0 0.0
    %181 = vmatpush2.msra.mxu0 0.0
    %182 = vmatprep.subr.mxu0 0.0
    %183 = vmatpush2.msra.mxu0 0.0
    %184 = vmatprep.mubr.f32.mxu0 0.0
    %185 = vmatmul.mubr.f32.gmra.mxu0 %v118
    %v186 = vpop.f32.mrf.mxu0
    %v187 = vadd.f32 %v114, %v186
    %v188 = vpop.f32.mrf.mxu0
    %189 = vdwg.mxu0
    %190 = vst [vmem:[#allocation2] sm:$0x3] %v187
    // Predicated region
    $region22: #{dnn_forward_feature_major.1} parent=1 // pred_check
      _
    $region23: #{dnn_forward_feature_major.1} parent=1 // pred_check_branch
      %192 = sbr.rel (0) target = $region25
    $region24: #{dnn_forward_feature_major.1} parent=1 // pred_region
      %s194 = ssub.s32 32, 32
      %195 = vsyncadd [#allocation3], %s194
      %s197 = sshll.u32 [#allocation2], 4
      %s198 = int_to_ptr.vmem [resolvable:$true] %s197
      %200 = dma.vmem_to_hbm [thread:$0]  %s198, 32, %s5, [#allocation3]
    $region25: #{dnn_forward_feature_major.1} parent=1 // pred_fallthru
      _
    // Predicated region
    $region26: #{dnn_forward_feature_major.1} parent=1 // pred_check
      _
    $region27: #{dnn_forward_feature_major.1} parent=1 // pred_check_branch
      %202 = sbr.rel (0) target = $region29
    $region28: #{dnn_forward_feature_major.1} parent=1 // pred_region
      %203 = dma.done [#allocation3], 32
    $region29: #{dnn_forward_feature_major.1} parent=1 // pred_fallthru
      _
    %204 = vsyncpa [#allocation3], 1

</llo_original>
